<compile_context>
chip_gen: v5e
topology: v5e:2x2
jax: 0.10.0
libtpu: 0.0.40
codegen_flags: <defaults>
</compile_context>

<pallas_src>
import functools

import jax
import jax.numpy as jnp
from jax.experimental import pallas as pl
from jax.experimental.pallas import tpu as pltpu


def _round_up(x: int, m: int) -> int:
    return ((x + m - 1) // m) * m


def _lr_kernel(x_ref, w_ref, b_ref, o_ref, acc_ref):
    k = pl.program_id(2)

    @pl.when(k == 0)
    def _init():
        acc_ref[...] = jnp.zeros_like(acc_ref)

    # x tile: (TM, TK); w tile: (TN, TK) in PyTorch layout. Contract the K dim
    # of both -> (TM, TN) partial product, accumulated in f32 on the MXU.
    acc_ref[...] += jax.lax.dot_general(
        x_ref[...], w_ref[...],
        dimension_numbers=(((1,), (1,)), ((), ())),
        preferred_element_type=jnp.float32)

    @pl.when(k == pl.num_programs(2) - 1)
    def _finalize():
        z = acc_ref[...] + b_ref[...]              # (TM, TN) + (1, TN)
        # Exact sigmoid (exp goes to the EUP slot in the epilogue; effectively
        # free). pl.reciprocal(..., approx=True) is a further micro-opt if
        # ULP-level exactness is not required.
        o_ref[...] = jax.nn.sigmoid(z).astype(o_ref.dtype)


@functools.partial(jax.jit, static_argnames=("tm", "tn", "tk", "compute_dtype"))
def lr_forward(x, weight, bias, *, tm=256, tn=256, tk=512, compute_dtype=None):
    """x: (B, n_input); weight: (n_output, n_input) (PyTorch layout);
    bias: (n_output,).  Returns sigmoid(x @ weight.T + bias), shape (B, n_output)."""
    B, K = x.shape
    N = weight.shape[0]
    out_dtype = x.dtype

    # Lane/sublane-aligned tile sizes (K/N tiles multiples of 128, M tile a
    # multiple of 8), clipped to the (aligned) problem size.
    tm_ = min(tm, _round_up(B, 8))
    tn_ = min(tn, _round_up(N, 128))
    tk_ = min(tk, _round_up(K, 128))
    Mp = _round_up(B, tm_)
    Np = _round_up(N, tn_)
    Kp = _round_up(K, tk_)

    # Zero-pad: zeros along K contribute nothing to the dot; padded M rows /
    # N columns are sliced off below. For repeated calls with fixed params the
    # weight/bias padding should be hoisted out of the hot path (done once).
    xp = x if (Mp == B and Kp == K) else jnp.pad(x, ((0, Mp - B), (0, Kp - K)))
    wp = (weight if (Np == N and Kp == K)
          else jnp.pad(weight, ((0, Np - N), (0, Kp - K))))
    bp = (bias if Np == N else jnp.pad(bias, (0, Np - N))).reshape(1, Np)

    if compute_dtype is not None:                  # e.g. jnp.bfloat16 on v6e
        xp = xp.astype(compute_dtype)
        wp = wp.astype(compute_dtype)
    bp = bp.astype(jnp.float32)

    grid = (Mp // tm_, Np // tn_, Kp // tk_)

    out = pl.pallas_call(
        _lr_kernel,
        out_shape=jax.ShapeDtypeStruct((Mp, Np), out_dtype),
        grid_spec=pltpu.PrefetchScalarGridSpec(
            num_scalar_prefetch=0,
            grid=grid,
            in_specs=[
                pl.BlockSpec((tm_, tk_), lambda i, j, k: (i, k)),   # x
                pl.BlockSpec((tn_, tk_), lambda i, j, k: (j, k)),   # weight
                pl.BlockSpec((1, tn_), lambda i, j, k: (0, j)),     # bias
            ],
            out_specs=pl.BlockSpec((tm_, tn_), lambda i, j, k: (i, j)),
            scratch_shapes=[pltpu.VMEM((tm_, tn_), jnp.float32)],
        ),
        compiler_params=pltpu.CompilerParams(
            # M / N tiles are independent (megacore-shardable on v7x);
            # K is the reduction axis: "arbitrary" and innermost so the
            # accumulator stays VMEM-resident.
            dimension_semantics=("parallel", "parallel", "arbitrary")),
    )(xp, wp, bp)

    if Mp != B or Np != N:
        out = out[:B, :N]
    return out


if __name__ == "__main__":
    # Small shapes consistent with the module: LR(n_input=32, n_output=16)
    B, n_input, n_output = 8, 32, 16

    key = jax.random.PRNGKey(0)
    kx, kw, kb = jax.random.split(key, 3)

    # Deterministic param init mimicking nn.Linear default:
    # U(-1/sqrt(n_input), 1/sqrt(n_input))
    bound = 1.0 / jnp.sqrt(jnp.float32(n_input))
    weight = jax.random.uniform(kw, (n_output, n_input), jnp.float32,
                                minval=-bound, maxval=bound)
    bias = jax.random.uniform(kb, (n_output,), jnp.float32,
                              minval=-bound, maxval=bound)
    x = jax.random.normal(kx, (B, n_input), jnp.float32)

    out = lr_forward(x, weight, bias)
    out = jax.block_until_ready(out)

    # Cross-check against plain-JAX reference.
    ref = jax.nn.sigmoid(x @ weight.T + bias)
    assert out.shape == (B, n_output)
    assert jnp.allclose(out, ref, atol=1e-5, rtol=1e-5)

    print("KERNEL_OK")
</pallas_src>

<mosaic_0001>
module attributes {stable_mosaic.version = 11 : i64} {
  func.func @_lr_kernel(%arg0: i32, %arg1: i32, %arg2: i32, %arg3: memref<8x128xf32, #tpu.memory_space<vmem>>, %arg4: memref<128x128xf32, #tpu.memory_space<vmem>>, %arg5: memref<1x128xf32, #tpu.memory_space<vmem>>, %arg6: memref<8x128xf32, #tpu.memory_space<vmem>>, %arg7: memref<8x128xf32, #tpu.memory_space<vmem>>) attributes {dimension_semantics = [#tpu.dimension_semantics<parallel>, #tpu.dimension_semantics<parallel>, #tpu.dimension_semantics<arbitrary>], iteration_bounds = array<i64: 1, 1, 1>, scalar_prefetch = 0 : i64, scratch_operands = 1 : i64, tpu.core_type = #tpu.core_type<tc>, window_params = [{transform_indices = @transform_0, window_bounds = array<i64: 8, 128>}, {transform_indices = @transform_1, window_bounds = array<i64: 128, 128>}, {transform_indices = @transform_2, window_bounds = array<i64: 1, 128>}, {transform_indices = @transform_3, window_bounds = array<i64: 8, 128>}]} {
    %c0_i32 = arith.constant 0 : i32
    %0 = arith.cmpi eq, %arg2, %c0_i32 : i32
    %1 = arith.extui %0 : i1 to i32
    %c0_i32_0 = arith.constant 0 : i32
    %2 = arith.cmpi ne, %1, %c0_i32_0 : i32
    scf.if %2 {
      %cst_10 = arith.constant 0.000000e+00 : f32
      %12 = vector.broadcast %cst_10 : f32 to vector<8x128xf32>
      %c0_11 = arith.constant 0 : index
      %c0_12 = arith.constant 0 : index
      %13 = vector.load %arg7[%c0_11, %c0_12] : memref<8x128xf32, #tpu.memory_space<vmem>>, vector<8x128xf32>
      tpu.vector_store %arg7[%c0_11, %c0_12], %12 {strides = array<i32>} : memref<8x128xf32, #tpu.memory_space<vmem>>, vector<8x128xf32>,
    } else {
    }
    %c0 = arith.constant 0 : index
    %c0_1 = arith.constant 0 : index
    %3 = vector.load %arg7[%c0, %c0_1] : memref<8x128xf32, #tpu.memory_space<vmem>>, vector<8x128xf32>
    %c0_2 = arith.constant 0 : index
    %c0_3 = arith.constant 0 : index
    %4 = vector.load %arg3[%c0_2, %c0_3] : memref<8x128xf32, #tpu.memory_space<vmem>>, vector<8x128xf32>
    %c0_4 = arith.constant 0 : index
    %c0_5 = arith.constant 0 : index
    %5 = vector.load %arg4[%c0_4, %c0_5] : memref<128x128xf32, #tpu.memory_space<vmem>>, vector<128x128xf32>
    %cst = arith.constant dense<0.000000e+00> : vector<8x128xf32>
    %6 = tpu.matmul %4, %5, %cst {dimension_numbers = #tpu.dot_dimension_numbers<[1], [1], [0], [0], [0, 0, 1, 0], [], []>} : vector<8x128xf32>, vector<128x128xf32>, vector<8x128xf32> -> vector<8x128xf32>
    %7 = arith.addf %3, %6 : vector<8x128xf32>
    %c0_6 = arith.constant 0 : index
    %c0_7 = arith.constant 0 : index
    %8 = vector.load %arg7[%c0_6, %c0_7] : memref<8x128xf32, #tpu.memory_space<vmem>>, vector<8x128xf32>
    tpu.vector_store %arg7[%c0_6, %c0_7], %7 {strides = array<i32>} : memref<8x128xf32, #tpu.memory_space<vmem>>, vector<8x128xf32>,
    %c0_i32_8 = arith.constant 0 : i32
    %9 = arith.cmpi eq, %arg2, %c0_i32_8 : i32
    %10 = arith.extui %9 : i1 to i32
    %c0_i32_9 = arith.constant 0 : i32
    %11 = arith.cmpi ne, %10, %c0_i32_9 : i32
    scf.if %11 {
      %c0_10 = arith.constant 0 : index
      %c0_11 = arith.constant 0 : index
      %12 = vector.load %arg7[%c0_10, %c0_11] : memref<8x128xf32, #tpu.memory_space<vmem>>, vector<8x128xf32>
      %c0_12 = arith.constant 0 : index
      %c0_13 = arith.constant 0 : index
      %13 = vector.load %arg5[%c0_12, %c0_13] : memref<1x128xf32, #tpu.memory_space<vmem>>, vector<1x128xf32>
      %14 = vector.broadcast %13 : vector<1x128xf32> to vector<8x128xf32>
      %15 = arith.addf %12, %14 : vector<8x128xf32>
      %16 = arith.negf %15 : vector<8x128xf32>
      %17 = math.exp %16 : vector<8x128xf32>
      %cst_14 = arith.constant 1.000000e+00 : f32
      %18 = vector.broadcast %cst_14 : f32 to vector<8x128xf32>
      %19 = arith.addf %18, %17 : vector<8x128xf32>
      %20 = arith.divf %18, %19 : vector<8x128xf32>
      %c0_15 = arith.constant 0 : index
      %c0_16 = arith.constant 0 : index
      %21 = vector.load %arg6[%c0_15, %c0_16] : memref<8x128xf32, #tpu.memory_space<vmem>>, vector<8x128xf32>
      tpu.vector_store %arg6[%c0_15, %c0_16], %20 {strides = array<i32>} : memref<8x128xf32, #tpu.memory_space<vmem>>, vector<8x128xf32>,
    } else {
    }
    return
  }
  func.func @transform_0(%arg0: i32, %arg1: i32, %arg2: i32) -> (i32, i32) {
    %c0_i32 = arith.constant 0 : i32
    return %arg0, %arg2 : i32, i32
  }
  func.func @transform_1(%arg0: i32, %arg1: i32, %arg2: i32) -> (i32, i32) {
    %c0_i32 = arith.constant 0 : i32
    return %arg1, %arg2 : i32, i32
  }
  func.func @transform_2(%arg0: i32, %arg1: i32, %arg2: i32) -> (i32, i32) {
    %c0_i32 = arith.constant 0 : i32
    %c0_i32_0 = arith.constant 0 : i32
    return %c0_i32, %arg1 : i32, i32
  }
  func.func @transform_3(%arg0: i32, %arg1: i32, %arg2: i32) -> (i32, i32) {
    %c0_i32 = arith.constant 0 : i32
    return %arg0, %arg1 : i32, i32
  }
}

</mosaic_0001>

<llo_original>
// kernel: lr_forward.1
$region0: #{lr_forward.1}
  #allocation0 [shape = 'u32[]', space=smem, size = 0x4, offset = 0x4, fixed_abs, tag = 'smem constant byte address 0x4 - core index']
  #allocation1 [shape = 'u32[72,128]{1,0:T(1,128)}', space=vmem, size = 0x9000, scoped, tag = 'internal scratch']
  #allocation2 [shape = 'f32[8,128]{1,0:T(8,128)}', space=vmem, size = 0x1000, scoped, tag = 'scratch operand']
  %s0 = inlined_call_operand.vmem [shape: f32[8,128], index: 0, kind: input, shape index: {}]
  %s1 = inlined_call_operand.vmem [shape: f32[128,128], index: 1, kind: input, shape index: {}]
  %s2 = inlined_call_operand.vmem [shape: f32[1,128], index: 2, kind: input, shape index: {}]
  %s3 = inlined_call_operand.hbm [shape: f32[8,128], index: 3, kind: output, shape index: {}]
  %s4 = sld [smem:[#allocation0]]
  $region30: #{lr_forward.1} parent=0
    _
  %s6 = ssub.s32 1, %s4
  %s7 = scalar_select 0, %s6, %s4
  $region1: #{lr_forward.1} parent=0
    #allocation3 [shape = 'u8[4096]{0}', space=vmem, size = 0x1000, scoped, tag = 'output window, operand 0, single buffered']
    #allocation4 [shape = 's32[1]{0}', space=sflag, size = 0x4, scoped, tag = 'scoped memory for lr_forward.1']
    %8 = vsyncpa [#allocation4], 0
    // Predicated region
    $region2: #{lr_forward.1} parent=1 // pred_check
      _
    $region3: #{lr_forward.1} parent=1 // pred_check_branch
      %10 = sbr.rel (0) target = $region5
    $region4: #{lr_forward.1} parent=1 // pred_region
      _
    $region5: #{lr_forward.1} parent=1 // pred_fallthru
      _
    // Predicated region
    $region6: #{lr_forward.1} parent=1 // pred_check
      _
    $region7: #{lr_forward.1} parent=1 // pred_check_branch
      %12 = sbr.rel (0) target = $region9
    $region8: #{lr_forward.1} parent=1 // pred_region
      _
    $region9: #{lr_forward.1} parent=1 // pred_fallthru
      _
    // Predicated region
    $region10: #{lr_forward.1} parent=1 // pred_check
      _
    $region11: #{lr_forward.1} parent=1 // pred_check_branch
      %14 = sbr.rel (0) target = $region13
    $region12: #{lr_forward.1} parent=1 // pred_region
      _
    $region13: #{lr_forward.1} parent=1 // pred_fallthru
      _
    %p15 = scmp.eq.s32.totalorder 0, 0
    // Predicated region
    $region14: #{lr_forward.1} parent=1 // pred_check
      %p16 = pneg %p15
    $region15: #{lr_forward.1} parent=1 // pred_check_branch
      %18 = sbr.rel (%p16) target = $region17
    $region16: #{lr_forward.1} parent=1 // pred_region
      %19 = vst [vmem:[#allocation2] sm:$0xff] 0.0
    $region17: #{lr_forward.1} parent=1 // pred_fallthru
      _
    %v20 = vld [vmem:[#allocation2] sm:$0xff]
    %v21 = vld [vmem:[%s0] sm:$0xff]
    %v22 = vld [vmem:[%s1] sm:$0xff]
    %v23 = vld [vmem:[%s1 + $0x8] sm:$0xff]
    %v24 = vld [vmem:[%s1 + $0x10] sm:$0xff]
    %v25 = vld [vmem:[%s1 + $0x18] sm:$0xff]
    %v26 = vld [vmem:[%s1 + $0x20] sm:$0xff]
    %v27 = vld [vmem:[%s1 + $0x28] sm:$0xff]
    %v28 = vld [vmem:[%s1 + $0x30] sm:$0xff]
    %v29 = vld [vmem:[%s1 + $0x38] sm:$0xff]
    %v30 = vld [vmem:[%s1 + $0x40] sm:$0xff]
    %v31 = vld [vmem:[%s1 + $0x48] sm:$0xff]
    %v32 = vld [vmem:[%s1 + $0x50] sm:$0xff]
    %v33 = vld [vmem:[%s1 + $0x58] sm:$0xff]
    %v34 = vld [vmem:[%s1 + $0x60] sm:$0xff]
    %v35 = vld [vmem:[%s1 + $0x68] sm:$0xff]
    %v36 = vld [vmem:[%s1 + $0x70] sm:$0xff]
    %v37 = vld [vmem:[%s1 + $0x78] sm:$0xff]
    %38 = vmatpush.xpose.msra.mxu0 %v37
    %39 = vmatpush.xpose.msra.mxu0 %v36
    %40 = vmatpush.xpose.msra.mxu0 %v35
    %41 = vmatpush.xpose.msra.mxu0 %v34
    %42 = vmatpush.xpose.msra.mxu0 %v33
    %43 = vmatpush.xpose.msra.mxu0 %v32
    %44 = vmatpush.xpose.msra.mxu0 %v31
    %45 = vmatpush.xpose.msra.mxu0 %v30
    %46 = vmatpush.xpose.msra.mxu0 %v29
    %47 = vmatpush.xpose.msra.mxu0 %v28
    %48 = vmatpush.xpose.msra.mxu0 %v27
    %49 = vmatpush.xpose.msra.mxu0 %v26
    %50 = vmatpush.xpose.msra.mxu0 %v25
    %51 = vmatpush.xpose.msra.mxu0 %v24
    %52 = vmatpush.xpose.msra.mxu0 %v23
    %53 = vmatpush.xpose.msra.mxu0 %v22
    %54 = vmatmul.f32.gmra.mxu0 %v21
    %v55 = vpop.f32.mrf.mxu0
    %v56 = vadd.f32 0.0, %v55
    %57 = vdwg.mxu0
    %v58 = vadd.f32 %v20, %v56
    %59 = vst [vmem:[#allocation2] sm:$0xff] %v58
    // Predicated region
    $region18: #{lr_forward.1} parent=1 // pred_check
      %p60 = pneg %p15
    $region19: #{lr_forward.1} parent=1 // pred_check_branch
      %62 = sbr.rel (%p60) target = $region21
    $region20: #{lr_forward.1} parent=1 // pred_region
      %v63 = vld [vmem:[#allocation2] sm:$0xff]
      %v64 = vld [vmem:[%s2] sm:$0x1]
      %v66 = vperm.slane %v64, 0
      %v68 = vadd.f32 %v63, %v66
      %v69 = vxor.u32 %v68, 2147483648
      %v70 = vmul.f32 %v69, 1.442695
      %v71 = vpow.pop %v70
      %v72 = vadd.f32 %v71, 1.0
      %v73 = vrcp.pop %v72
      %v74 = vmul.f32 %v72, %v73
      %v75 = vsub.f32 1.0, %v74
      %v76 = vmul.f32 %v73, %v75
      %v77 = vadd.f32 %v73, %v76
      %vm78 = vweird.f32 %v72
      %vm79 = vweird.f32 %v73
      %vm80 = vmor %vm78, %vm79
      %v81 = vsel %vm80, %v73, %v77
      %v82 = vand.u32 2147483647, %v72
      %vm83 = vcmp.eq.f32.partialorder %v82, 8.507059e+37
      %v84 = vand.u32 %v72, 2147483648
      %v85 = vor.u32 1.1754944e-38, %v84
      %v86 = vsel %vm83, %v85, %v81
      %v87 = vmul.f32 1.0, %v86
      %88 = vst [vmem:[#allocation3] sm:$0xff] %v87
    $region21: #{lr_forward.1} parent=1 // pred_fallthru
      _
    // Predicated region
    $region22: #{lr_forward.1} parent=1 // pred_check
      _
    $region23: #{lr_forward.1} parent=1 // pred_check_branch
      %90 = sbr.rel (0) target = $region25
    $region24: #{lr_forward.1} parent=1 // pred_region
      %92 = vsyncadd [#allocation4], 0
      %s94 = sshll.u32 [#allocation3], 4
      %s95 = int_to_ptr.vmem [resolvable:$true] %s94
      %s96 = sshll.u32 %s3, 4
      %s97 = int_to_ptr.hbm [resolvable:$true] %s96
      %99 = dma.vmem_to_hbm [thread:$0]  %s95, 128, %s97, [#allocation4]
    $region25: #{lr_forward.1} parent=1 // pred_fallthru
      _
    // Predicated region
    $region26: #{lr_forward.1} parent=1 // pred_check
      _
    $region27: #{lr_forward.1} parent=1 // pred_check_branch
      %101 = sbr.rel (0) target = $region29
    $region28: #{lr_forward.1} parent=1 // pred_region
      %103 = dma.done [#allocation4], 128
    $region29: #{lr_forward.1} parent=1 // pred_fallthru
      _
    %104 = vsyncpa [#allocation4], 1

</llo_original>
